<compile_context>
chip_gen: v6e
topology: v6e:2x2x1
jax: 0.10.0
libtpu: 0.0.40
codegen_flags: <defaults>
</compile_context>

<pallas_src>
import jax
import jax.numpy as jnp
from jax.experimental import pallas as pl
from jax.experimental.pallas import tpu as pltpu


# ----------------------------------------------------------------------------
# Fused Pallas kernel
# ----------------------------------------------------------------------------
def _fused_kernel(x1_ref, x2_ref,
                  w1_ref, b1_ref,
                  wf_ref, bf_ref,
                  w2a_ref, w2b_ref, b2_ref,
                  o_ref):
    # CL1 + ReLU : (bm, 512) @ (512, 128) -> (bm, 128), bf16 in / f32 acc.
    f1 = jnp.dot(x1_ref[...], w1_ref[...], preferred_element_type=jnp.float32)
    f1 = jnp.maximum(f1 + b1_ref[...], 0.0).astype(w2a_ref.dtype)

    # folded (Conv1 -> permute -> flatten -> res linear) + ReLU :
    # (bm, C*H*W) @ (C*H*W, 512) -> (bm, 512)
    f2 = jnp.dot(x2_ref[...], wf_ref[...], preferred_element_type=jnp.float32)
    f2 = jnp.maximum(f2 + bf_ref[...], 0.0).astype(w2b_ref.dtype)

    # CL2 without concat: split-weight accumulate, lane-dense padded output.
    y = jnp.dot(f1, w2a_ref[...], preferred_element_type=jnp.float32)
    y = y + jnp.dot(f2, w2b_ref[...], preferred_element_type=jnp.float32)
    o_ref[...] = (y + b2_ref[...]).astype(o_ref.dtype)


# ----------------------------------------------------------------------------
# One-time parameter preparation (weight folding / padding / casting)
# ----------------------------------------------------------------------------
def prepare_params(params, *, img_2d_shape, num_classes,
                   dot_dtype=jnp.bfloat16, lane=128):
    """Fold conv1 into the surrogate res linear and pad CL2 to 128 lanes."""
    _, C, H, W = img_2d_shape
    D = params["conv1_w"].shape[0]
    K = C * H

    wc = params["conv1_w"].reshape(D, K).astype(jnp.float32)           # (D, K)
    rw = params["res_w"].reshape(D, W, -1).astype(jnp.float32)         # (D, W, F)
    w_fold = jnp.einsum("dk,dwf->kwf", wc, rw).reshape(K * W, -1)      # (K*W, F)
    b_fold = params["res_b"] + jnp.einsum("d,dwf->f", params["conv1_b"], rw)

    n_pad = max(lane, ((num_classes + lane - 1) // lane) * lane)
    cl2_w = params["cl2_w"].astype(jnp.float32)
    w2 = jnp.zeros((cl2_w.shape[0], n_pad), jnp.float32).at[:, :num_classes].set(cl2_w)
    b2 = jnp.zeros((n_pad,), jnp.float32).at[:num_classes].set(params["cl2_b"])
    n1 = params["cl1_w"].shape[1]                                      # 128

    return dict(
        cl1_w=params["cl1_w"].astype(dot_dtype),
        cl1_b=params["cl1_b"].reshape(1, -1).astype(jnp.float32),
        res_w=w_fold.astype(dot_dtype),
        res_b=b_fold.reshape(1, -1).astype(jnp.float32),
        cl2_w_top=w2[:n1].astype(dot_dtype),
        cl2_w_bot=w2[n1:].astype(dot_dtype),
        cl2_b=b2.reshape(1, -1).astype(jnp.float32),
        num_classes=num_classes,
        n_pad=n_pad,
        dot_dtype=dot_dtype,
    )


def _pick_batch_block(n):
    # Prefer larger tiles (amortize the ~0.35 us / step grid overhead on
    # single-TC v5e/v6e); only tile if we get at least 2 blocks so the
    # "parallel" axis has something to shard on v7x.
    for bm in (512, 256, 128):
        if n >= 2 * bm:
            return bm
    return None  # tiny batch: single block, no grid overhead


# ----------------------------------------------------------------------------
# Forward (single fused pallas_call)
# ----------------------------------------------------------------------------
def simple_res_512_forward(prep, img_1d, img_2d):
    N = img_1d.shape[0]
    dot_dtype = prep["dot_dtype"]
    # Activations cast to MXU-native dtype in the wrapper: halves HBM bytes
    # for the dominant per-step DMA traffic and removes per-tile VPU casts.
    x1 = img_1d.astype(dot_dtype)                          # (N, 512)
    x2 = img_2d.reshape(N, -1).astype(dot_dtype)           # (N, C*H*W)

    K1 = x1.shape[1]                                       # 512
    K2 = x2.shape[1]                                       # C*H*W
    H1 = prep["cl1_w"].shape[1]                            # 128
    H2 = prep["res_w"].shape[1]                            # 512
    n_pad = prep["n_pad"]

    bm = _pick_batch_block(N)
    if bm is None:
        bm = N
        n_rows = N
    else:
        # Pad N so the grid is EVEN -> v7x's two TensorCores split the
        # "parallel" axis evenly (and no short/odd remainder block).
        step = 2 * bm
        n_rows = ((N + step - 1) // step) * step
    if n_rows != N:
        pad = n_rows - N
        x1 = jnp.pad(x1, ((0, pad), (0, 0)))
        x2 = jnp.pad(x2, ((0, pad), (0, 0)))

    grid = (n_rows // bm,)

    out = pl.pallas_call(
        _fused_kernel,
        out_shape=jax.ShapeDtypeStruct((n_rows, n_pad), jnp.float32),
        grid=grid,
        in_specs=[
            pl.BlockSpec((bm, K1), lambda i: (i, 0)),      # img_1d
            pl.BlockSpec((bm, K2), lambda i: (i, 0)),      # img_2d (flattened)
            pl.BlockSpec((K1, H1), lambda i: (0, 0)),      # cl1_w   (resident)
            pl.BlockSpec((1, H1), lambda i: (0, 0)),       # cl1_b
            pl.BlockSpec((K2, H2), lambda i: (0, 0)),      # folded conv+res W
            pl.BlockSpec((1, H2), lambda i: (0, 0)),       # folded bias
            pl.BlockSpec((H1, n_pad), lambda i: (0, 0)),   # cl2_w[:128] (padded)
            pl.BlockSpec((H2, n_pad), lambda i: (0, 0)),   # cl2_w[128:] (padded)
            pl.BlockSpec((1, n_pad), lambda i: (0, 0)),    # cl2_b (padded)
        ],
        out_specs=pl.BlockSpec((bm, n_pad), lambda i: (i, 0)),
        compiler_params=pltpu.CompilerParams(
            dimension_semantics=("parallel",)),
    )(x1, x2,
      prep["cl1_w"], prep["cl1_b"],
      prep["res_w"], prep["res_b"],
      prep["cl2_w_top"], prep["cl2_w_bot"], prep["cl2_b"])

    return out[:N, :prep["num_classes"]]


# ----------------------------------------------------------------------------
# References for sanity checking
# ----------------------------------------------------------------------------
def reference_forward_f32(params, img_1d, img_2d):
    """Plain JAX, unfolded, full f32 path (semantic reference)."""
    f1 = jnp.maximum(img_1d @ params["cl1_w"] + params["cl1_b"], 0.0)
    N, C, H, W = img_2d.shape
    D = params["conv1_w"].shape[0]
    x_flat = img_2d.reshape(N, C * H, W)
    w_flat = params["conv1_w"].reshape(D, C * H)
    conv = jnp.einsum("dk,nkw->ndw", w_flat, x_flat) + params["conv1_b"][None, :, None]
    res_in = jnp.transpose(conv.reshape(N, D, 1, W), (0, 2, 1, 3))
    f2 = jnp.maximum(res_in.reshape(N, -1) @ params["res_w"] + params["res_b"], 0.0)
    cat = jnp.concatenate([f1, f2], axis=1)
    return cat @ params["cl2_w"] + params["cl2_b"]


def reference_forward_matched(prep, img_1d, img_2d):
    """Plain JAX using the SAME folded/padded bf16 operands as the kernel."""
    dt = prep["dot_dtype"]
    N = img_1d.shape[0]
    x1 = img_1d.astype(dt)
    x2 = img_2d.reshape(N, -1).astype(dt)
    f1 = jnp.maximum(
        jnp.dot(x1, prep["cl1_w"], preferred_element_type=jnp.float32)
        + prep["cl1_b"], 0.0).astype(dt)
    f2 = jnp.maximum(
        jnp.dot(x2, prep["res_w"], preferred_element_type=jnp.float32)
        + prep["res_b"], 0.0).astype(dt)
    y = (jnp.dot(f1, prep["cl2_w_top"], preferred_element_type=jnp.float32)
         + jnp.dot(f2, prep["cl2_w_bot"], preferred_element_type=jnp.float32)
         + prep["cl2_b"])
    return y[:, :prep["num_classes"]]


# ----------------------------------------------------------------------------
# Main
# ----------------------------------------------------------------------------
if __name__ == "__main__":
    # Small, shape-consistent config.
    N = 2                 # batch
    image_size = 16       # H = W = 16
    channels = 1
    dim = 32              # Conv1 out channels
    num_classes = 10
    last_layer_num = 512  # resnet18 feature width

    H = W = image_size
    res_in_feats = 1 * dim * W          # flattened (1, dim, W) after permute

    key = jax.random.PRNGKey(0)
    ks = jax.random.split(key, 10)

    def init(k, shape, scale=0.02):
        return (scale * jax.random.normal(k, shape)).astype(jnp.float32)

    params = {
        # CL1: Linear(512, 128)  (stored as (in, out))
        "cl1_w": init(ks[0], (512, 128)),
        "cl1_b": init(ks[1], (128,)),
        # Conv1: Conv2d(channels, dim, (H, 1))
        "conv1_w": init(ks[2], (dim, channels, H, 1)),
        "conv1_b": init(ks[3], (dim,)),
        # Surrogate resnet18 feature extractor -> 512 features
        "res_w": init(ks[4], (res_in_feats, last_layer_num)),
        "res_b": init(ks[5], (last_layer_num,)),
        # CL2: Linear(128 + 512, num_classes)
        "cl2_w": init(ks[6], (128 + last_layer_num, num_classes)),
        "cl2_b": init(ks[7], (num_classes,)),
    }

    img_1d = jax.random.normal(ks[8], (N, 512), dtype=jnp.float32)
    img_2d = jax.random.normal(ks[9], (N, channels, H, W), dtype=jnp.float32)

    # One-time weight folding / padding.  bf16 operands = MXU-native dtype and
    # half the HBM bytes (f32 accumulation + f32 bias/ReLU inside the kernel).
    prep = prepare_params(params, img_2d_shape=img_2d.shape,
                          num_classes=num_classes, dot_dtype=jnp.bfloat16)

    out = simple_res_512_forward(prep, img_1d, img_2d)
    out = jax.block_until_ready(out)
    assert out.shape == (N, num_classes), out.shape

    # Strict check vs a JAX reference using the identical bf16 folded operands.
    ref_m = jax.block_until_ready(reference_forward_matched(prep, img_1d, img_2d))
    assert jnp.allclose(out, ref_m, rtol=2e-3, atol=2e-3), \
        "mismatch vs bf16-matched reference"

    # Loose check vs the unfolded full-f32 semantic reference (bf16 rounding +
    # folded summation order make a 1e-4 f32 tolerance unattainable by design).
    ref_f32 = jax.block_until_ready(reference_forward_f32(params, img_1d, img_2d))
    assert jnp.allclose(out, ref_f32, rtol=5e-2, atol=5e-2), \
        "mismatch vs f32 reference"

    print("KERNEL_OK")
</pallas_src>

<mosaic_0001>
module attributes {stable_mosaic.version = 11 : i64} {
  func.func @_fused_kernel(%arg0: i32, %arg1: memref<2x512xbf16, #tpu.memory_space<vmem>>, %arg2: memref<2x256xbf16, #tpu.memory_space<vmem>>, %arg3: memref<512x128xbf16, #tpu.memory_space<vmem>>, %arg4: memref<1x128xf32, #tpu.memory_space<vmem>>, %arg5: memref<256x512xbf16, #tpu.memory_space<vmem>>, %arg6: memref<1x512xf32, #tpu.memory_space<vmem>>, %arg7: memref<128x128xbf16, #tpu.memory_space<vmem>>, %arg8: memref<512x128xbf16, #tpu.memory_space<vmem>>, %arg9: memref<1x128xf32, #tpu.memory_space<vmem>>, %arg10: memref<2x128xf32, #tpu.memory_space<vmem>>) attributes {dimension_semantics = [#tpu.dimension_semantics<parallel>], iteration_bounds = array<i64: 1>, scalar_prefetch = 0 : i64, scratch_operands = 0 : i64, tpu.core_type = #tpu.core_type<tc>, window_params = [{transform_indices = @transform_0, window_bounds = array<i64: 2, 512>}, {transform_indices = @transform_1, window_bounds = array<i64: 2, 256>}, {pipeline_mode = #tpu.pipeline_mode<synchronous>, transform_indices = @transform_2, window_bounds = array<i64: 512, 128>}, {pipeline_mode = #tpu.pipeline_mode<synchronous>, transform_indices = @transform_3, window_bounds = array<i64: 1, 128>}, {pipeline_mode = #tpu.pipeline_mode<synchronous>, transform_indices = @transform_4, window_bounds = array<i64: 256, 512>}, {pipeline_mode = #tpu.pipeline_mode<synchronous>, transform_indices = @transform_5, window_bounds = array<i64: 1, 512>}, {pipeline_mode = #tpu.pipeline_mode<synchronous>, transform_indices = @transform_6, window_bounds = array<i64: 128, 128>}, {pipeline_mode = #tpu.pipeline_mode<synchronous>, transform_indices = @transform_7, window_bounds = array<i64: 512, 128>}, {pipeline_mode = #tpu.pipeline_mode<synchronous>, transform_indices = @transform_8, window_bounds = array<i64: 1, 128>}, {transform_indices = @transform_9, window_bounds = array<i64: 2, 128>}]} {
    %c0 = arith.constant 0 : index
    %c0_0 = arith.constant 0 : index
    %0 = vector.load %arg1[%c0, %c0_0] : memref<2x512xbf16, #tpu.memory_space<vmem>>, vector<2x512xbf16>
    %c0_1 = arith.constant 0 : index
    %c0_2 = arith.constant 0 : index
    %1 = vector.load %arg3[%c0_1, %c0_2] : memref<512x128xbf16, #tpu.memory_space<vmem>>, vector<512x128xbf16>
    %cst = arith.constant dense<0.000000e+00> : vector<2x128xf32>
    %2 = tpu.matmul %0, %1, %cst {dimension_numbers = #tpu.dot_dimension_numbers<[1], [0], [0], [1], [0, 0, 1, 1], [], []>} : vector<2x512xbf16>, vector<512x128xbf16>, vector<2x128xf32> -> vector<2x128xf32>
    %c0_3 = arith.constant 0 : index
    %c0_4 = arith.constant 0 : index
    %3 = vector.load %arg4[%c0_3, %c0_4] : memref<1x128xf32, #tpu.memory_space<vmem>>, vector<1x128xf32>
    %4 = vector.broadcast %3 : vector<1x128xf32> to vector<2x128xf32>
    %5 = arith.addf %2, %4 : vector<2x128xf32>
    %cst_5 = arith.constant 0.000000e+00 : f32
    %6 = vector.broadcast %cst_5 : f32 to vector<2x128xf32>
    %7 = arith.maximumf %5, %6 : vector<2x128xf32>
    %8 = arith.truncf %7 : vector<2x128xf32> to vector<2x128xbf16>
    %c0_6 = arith.constant 0 : index
    %c0_7 = arith.constant 0 : index
    %9 = vector.load %arg2[%c0_6, %c0_7] : memref<2x256xbf16, #tpu.memory_space<vmem>>, vector<2x256xbf16>
    %c0_8 = arith.constant 0 : index
    %c0_9 = arith.constant 0 : index
    %10 = vector.load %arg5[%c0_8, %c0_9] : memref<256x512xbf16, #tpu.memory_space<vmem>>, vector<256x512xbf16>
    %cst_10 = arith.constant dense<0.000000e+00> : vector<2x512xf32>
    %11 = tpu.matmul %9, %10, %cst_10 {dimension_numbers = #tpu.dot_dimension_numbers<[1], [0], [0], [1], [0, 0, 1, 1], [], []>} : vector<2x256xbf16>, vector<256x512xbf16>, vector<2x512xf32> -> vector<2x512xf32>
    %c0_11 = arith.constant 0 : index
    %c0_12 = arith.constant 0 : index
    %12 = vector.load %arg6[%c0_11, %c0_12] : memref<1x512xf32, #tpu.memory_space<vmem>>, vector<1x512xf32>
    %13 = vector.broadcast %12 : vector<1x512xf32> to vector<2x512xf32>
    %14 = arith.addf %11, %13 : vector<2x512xf32>
    %cst_13 = arith.constant 0.000000e+00 : f32
    %15 = vector.broadcast %cst_13 : f32 to vector<2x512xf32>
    %16 = arith.maximumf %14, %15 : vector<2x512xf32>
    %17 = arith.truncf %16 : vector<2x512xf32> to vector<2x512xbf16>
    %c0_14 = arith.constant 0 : index
    %c0_15 = arith.constant 0 : index
    %18 = vector.load %arg7[%c0_14, %c0_15] : memref<128x128xbf16, #tpu.memory_space<vmem>>, vector<128x128xbf16>
    %cst_16 = arith.constant dense<0.000000e+00> : vector<2x128xf32>
    %19 = tpu.matmul %8, %18, %cst_16 {dimension_numbers = #tpu.dot_dimension_numbers<[1], [0], [0], [1], [0, 0, 1, 1], [], []>} : vector<2x128xbf16>, vector<128x128xbf16>, vector<2x128xf32> -> vector<2x128xf32>
    %c0_17 = arith.constant 0 : index
    %c0_18 = arith.constant 0 : index
    %20 = vector.load %arg8[%c0_17, %c0_18] : memref<512x128xbf16, #tpu.memory_space<vmem>>, vector<512x128xbf16>
    %cst_19 = arith.constant dense<0.000000e+00> : vector<2x128xf32>
    %21 = tpu.matmul %17, %20, %cst_19 {dimension_numbers = #tpu.dot_dimension_numbers<[1], [0], [0], [1], [0, 0, 1, 1], [], []>} : vector<2x512xbf16>, vector<512x128xbf16>, vector<2x128xf32> -> vector<2x128xf32>
    %22 = arith.addf %19, %21 : vector<2x128xf32>
    %c0_20 = arith.constant 0 : index
    %c0_21 = arith.constant 0 : index
    %23 = vector.load %arg9[%c0_20, %c0_21] : memref<1x128xf32, #tpu.memory_space<vmem>>, vector<1x128xf32>
    %24 = vector.broadcast %23 : vector<1x128xf32> to vector<2x128xf32>
    %25 = arith.addf %22, %24 : vector<2x128xf32>
    %c0_22 = arith.constant 0 : index
    %c0_23 = arith.constant 0 : index
    %26 = vector.load %arg10[%c0_22, %c0_23] : memref<2x128xf32, #tpu.memory_space<vmem>>, vector<2x128xf32>
    tpu.vector_store %arg10[%c0_22, %c0_23], %25 {strides = array<i32>} : memref<2x128xf32, #tpu.memory_space<vmem>>, vector<2x128xf32>,
    return
  }
  func.func @transform_0(%arg0: i32) -> (i32, i32) {
    %c0_i32 = arith.constant 0 : i32
    %c0_i32_0 = arith.constant 0 : i32
    return %arg0, %c0_i32 : i32, i32
  }
  func.func @transform_1(%arg0: i32) -> (i32, i32) {
    %c0_i32 = arith.constant 0 : i32
    %c0_i32_0 = arith.constant 0 : i32
    return %arg0, %c0_i32 : i32, i32
  }
  func.func @transform_2(%arg0: i32) -> (i32, i32) {
    %c0_i32 = arith.constant 0 : i32
    %c0_i32_0 = arith.constant 0 : i32
    %c0_i32_1 = arith.constant 0 : i32
    return %c0_i32, %c0_i32_0 : i32, i32
  }
  func.func @transform_3(%arg0: i32) -> (i32, i32) {
    %c0_i32 = arith.constant 0 : i32
    %c0_i32_0 = arith.constant 0 : i32
    %c0_i32_1 = arith.constant 0 : i32
    return %c0_i32, %c0_i32_0 : i32, i32
  }
  func.func @transform_4(%arg0: i32) -> (i32, i32) {
    %c0_i32 = arith.constant 0 : i32
    %c0_i32_0 = arith.constant 0 : i32
    %c0_i32_1 = arith.constant 0 : i32
    return %c0_i32, %c0_i32_0 : i32, i32
  }
  func.func @transform_5(%arg0: i32) -> (i32, i32) {
    %c0_i32 = arith.constant 0 : i32
    %c0_i32_0 = arith.constant 0 : i32
    %c0_i32_1 = arith.constant 0 : i32
    return %c0_i32, %c0_i32_0 : i32, i32
  }
  func.func @transform_6(%arg0: i32) -> (i32, i32) {
    %c0_i32 = arith.constant 0 : i32
    %c0_i32_0 = arith.constant 0 : i32
    %c0_i32_1 = arith.constant 0 : i32
    return %c0_i32, %c0_i32_0 : i32, i32
  }
  func.func @transform_7(%arg0: i32) -> (i32, i32) {
    %c0_i32 = arith.constant 0 : i32
    %c0_i32_0 = arith.constant 0 : i32
    %c0_i32_1 = arith.constant 0 : i32
    return %c0_i32, %c0_i32_0 : i32, i32
  }
  func.func @transform_8(%arg0: i32) -> (i32, i32) {
    %c0_i32 = arith.constant 0 : i32
    %c0_i32_0 = arith.constant 0 : i32
    %c0_i32_1 = arith.constant 0 : i32
    return %c0_i32, %c0_i32_0 : i32, i32
  }
  func.func @transform_9(%arg0: i32) -> (i32, i32) {
    %c0_i32 = arith.constant 0 : i32
    %c0_i32_0 = arith.constant 0 : i32
    return %arg0, %c0_i32 : i32, i32
  }
}

</mosaic_0001>

<llo_original>
// kernel: tpu_custom_call.1
$region0: #{tpu_custom_call.1}
  #allocation0 [shape = 'u32[]', space=smem, size = 0x4, offset = 0x4, fixed_abs, tag = 'smem constant byte address 0x4 - core index']
  #allocation1 [shape = 'u32[144,128]{1,0:T(1,128)}', space=vmem, size = 0x12000, scoped, tag = 'internal scratch']
  %s0 = inlined_call_operand.hbm [shape: bf16[2,512], index: 0, kind: input, shape index: {}]
  %s1 = inlined_call_operand.hbm [shape: bf16[2,256], index: 1, kind: input, shape index: {}]
  %s2 = inlined_call_operand.hbm [shape: bf16[512,128], index: 2, kind: input, shape index: {}]
  %s3 = inlined_call_operand.vmem [shape: f32[1,128], index: 3, kind: input, shape index: {}]
  %s4 = inlined_call_operand.hbm [shape: bf16[256,512], index: 4, kind: input, shape index: {}]
  %s5 = inlined_call_operand.vmem [shape: f32[1,512], index: 5, kind: input, shape index: {}]
  %s6 = inlined_call_operand.hbm [shape: bf16[128,128], index: 6, kind: input, shape index: {}]
  %s7 = inlined_call_operand.hbm [shape: bf16[512,128], index: 7, kind: input, shape index: {}]
  %s8 = inlined_call_operand.vmem [shape: f32[1,128], index: 8, kind: input, shape index: {}]
  %s9 = inlined_call_operand.hbm [shape: f32[2,128], index: 9, kind: output, shape index: {}]
  %s10 = sld [smem:[#allocation0]]
  $region70: #{tpu_custom_call.1} parent=0
    _
  %s12 = ssub.s32 1, %s10
  %s13 = scalar_select 0, %s12, %s10
  $region1: #{tpu_custom_call.1} parent=0
    #allocation2 [shape = 'u8[2048]{0}', space=vmem, size = 0x800, scoped, tag = 'input window, operand 0, single buffered']
    #allocation3 [shape = 's32[1]{0}', space=sflag, size = 0x4, scoped, tag = 'scoped memory for tpu_custom_call.1']
    #allocation4 [shape = 's32[1]{0}', space=sflag, size = 0x4, scoped, tag = 'scoped memory for tpu_custom_call.1']
    #allocation5 [shape = 'u8[1024]{0}', space=vmem, size = 0x400, scoped, tag = 'input window, operand 1, single buffered']
    #allocation6 [shape = 's32[1]{0}', space=sflag, size = 0x4, scoped, tag = 'scoped memory for tpu_custom_call.1']
    #allocation7 [shape = 'u8[131072]{0}', space=vmem, size = 0x20000, scoped, tag = 'input window, operand 2, single buffered']
    #allocation8 [shape = 'u8[262144]{0}', space=vmem, size = 0x40000, scoped, tag = 'input window, operand 4, single buffered']
    #allocation9 [shape = 's32[1]{0}', space=sflag, size = 0x4, scoped, tag = 'scoped memory for tpu_custom_call.1']
    #allocation10 [shape = 'u8[32768]{0}', space=vmem, size = 0x8000, scoped, tag = 'input window, operand 6, single buffered']
    #allocation11 [shape = 'u8[131072]{0}', space=vmem, size = 0x20000, scoped, tag = 'input window, operand 7, single buffered']
    #allocation12 [shape = 's32[1]{0}', space=sflag, size = 0x4, scoped, tag = 'scoped memory for tpu_custom_call.1']
    #allocation13 [shape = 'u8[1024]{0}', space=vmem, size = 0x400, scoped, tag = 'output window, operand 0, single buffered']
    %14 = vsyncpa [#allocation3], 0
    %15 = vsyncpa [#allocation6], 0
    %16 = vsyncpa [#allocation9], 0
    %17 = vsyncpa [#allocation12], 0
    %18 = vsyncpa [#allocation4], 0
    // Predicated region
    $region2: #{tpu_custom_call.1} parent=1 // pred_check
      _
    $region3: #{tpu_custom_call.1} parent=1 // pred_check_branch
      %20 = sbr.rel (0) target = $region5
    $region4: #{tpu_custom_call.1} parent=1 // pred_region
      %s22 = ssub.s32 64, 64
      %23 = vsyncadd [#allocation3], %s22
      %s25 = sshll.u32 [#allocation2], 4
      %s26 = int_to_ptr.vmem [resolvable:$true] %s25
      %28 = dma.hbm_to_vmem [thread:$0]  %s0, 64, %s26, [#allocation3]
    $region5: #{tpu_custom_call.1} parent=1 // pred_fallthru
      _
    // Predicated region
    $region6: #{tpu_custom_call.1} parent=1 // pred_check
      _
    $region7: #{tpu_custom_call.1} parent=1 // pred_check_branch
      %30 = sbr.rel (0) target = $region9
    $region8: #{tpu_custom_call.1} parent=1 // pred_region
      %s32 = ssub.s32 32, 32
      %33 = vsyncadd [#allocation6], %s32
      %s35 = sshll.u32 [#allocation5], 4
      %s36 = int_to_ptr.vmem [resolvable:$true] %s35
      %38 = dma.hbm_to_vmem [thread:$0]  %s1, 32, %s36, [#allocation6]
    $region9: #{tpu_custom_call.1} parent=1 // pred_fallthru
      _
    // Predicated region
    $region10: #{tpu_custom_call.1} parent=1 // pred_check
      _
    $region11: #{tpu_custom_call.1} parent=1 // pred_check_branch
      %40 = sbr.rel (0) target = $region13
    $region12: #{tpu_custom_call.1} parent=1 // pred_region
      %s42 = ssub.s32 4096, 4096
      %43 = vsyncadd [#allocation6], %s42
      %s44 = sshll.u32 [#allocation7], 4
      %s45 = int_to_ptr.vmem [resolvable:$true] %s44
      %50 = dma.hbm_to_vmem [thread:$0]  %s2, 4096, %s45, [#allocation6], 64, 64, 4
    $region13: #{tpu_custom_call.1} parent=1 // pred_fallthru
      _
    // Predicated region
    $region14: #{tpu_custom_call.1} parent=1 // pred_check
      _
    $region15: #{tpu_custom_call.1} parent=1 // pred_check_branch
      %52 = sbr.rel (0) target = $region17
    $region16: #{tpu_custom_call.1} parent=1 // pred_region
      _
    $region17: #{tpu_custom_call.1} parent=1 // pred_fallthru
      _
    // Predicated region
    $region18: #{tpu_custom_call.1} parent=1 // pred_check
      _
    $region19: #{tpu_custom_call.1} parent=1 // pred_check_branch
      %54 = sbr.rel (0) target = $region21
    $region20: #{tpu_custom_call.1} parent=1 // pred_region
      %s56 = ssub.s32 8192, 8192
      %57 = vsyncadd [#allocation9], %s56
      %s58 = sshll.u32 [#allocation8], 4
      %s59 = int_to_ptr.vmem [resolvable:$true] %s58
      %64 = dma.hbm_to_vmem [thread:$0]  %s4, 8192, %s59, [#allocation9], 256, 256, 16
    $region21: #{tpu_custom_call.1} parent=1 // pred_fallthru
      _
    // Predicated region
    $region22: #{tpu_custom_call.1} parent=1 // pred_check
      _
    $region23: #{tpu_custom_call.1} parent=1 // pred_check_branch
      %66 = sbr.rel (0) target = $region25
    $region24: #{tpu_custom_call.1} parent=1 // pred_region
      _
    $region25: #{tpu_custom_call.1} parent=1 // pred_fallthru
      _
    // Predicated region
    $region26: #{tpu_custom_call.1} parent=1 // pred_check
      _
    $region27: #{tpu_custom_call.1} parent=1 // pred_check_branch
      %68 = sbr.rel (0) target = $region29
    $region28: #{tpu_custom_call.1} parent=1 // pred_region
      %s70 = ssub.s32 1024, 1024
      %71 = vsyncadd [#allocation9], %s70
      %s72 = sshll.u32 [#allocation10], 4
      %s73 = int_to_ptr.vmem [resolvable:$true] %s72
      %78 = dma.hbm_to_vmem [thread:$0]  %s6, 1024, %s73, [#allocation9], 64, 64, 4
    $region29: #{tpu_custom_call.1} parent=1 // pred_fallthru
      _
    // Predicated region
    $region30: #{tpu_custom_call.1} parent=1 // pred_check
      _
    $region31: #{tpu_custom_call.1} parent=1 // pred_check_branch
      %80 = sbr.rel (0) target = $region33
    $region32: #{tpu_custom_call.1} parent=1 // pred_region
      %s82 = ssub.s32 4096, 4096
      %83 = vsyncadd [#allocation12], %s82
      %s84 = sshll.u32 [#allocation11], 4
      %s85 = int_to_ptr.vmem [resolvable:$true] %s84
      %90 = dma.hbm_to_vmem [thread:$0]  %s7, 4096, %s85, [#allocation12], 64, 64, 4
    $region33: #{tpu_custom_call.1} parent=1 // pred_fallthru
      _
    // Predicated region
    $region34: #{tpu_custom_call.1} parent=1 // pred_check
      _
    $region35: #{tpu_custom_call.1} parent=1 // pred_check_branch
      %92 = sbr.rel (0) target = $region37
    $region36: #{tpu_custom_call.1} parent=1 // pred_region
      _
    $region37: #{tpu_custom_call.1} parent=1 // pred_fallthru
      _
    // Predicated region
    $region38: #{tpu_custom_call.1} parent=1 // pred_check
      _
    $region39: #{tpu_custom_call.1} parent=1 // pred_check_branch
      %94 = sbr.rel (0) target = $region41
    $region40: #{tpu_custom_call.1} parent=1 // pred_region
      %95 = dma.done [#allocation3], 64
    $region41: #{tpu_custom_call.1} parent=1 // pred_fallthru
      _
    // Predicated region
    $region42: #{tpu_custom_call.1} parent=1 // pred_check
      _
    $region43: #{tpu_custom_call.1} parent=1 // pred_check_branch
      %97 = sbr.rel (0) target = $region45
    $region44: #{tpu_custom_call.1} parent=1 // pred_region
      %98 = dma.done [#allocation6], 32
    $region45: #{tpu_custom_call.1} parent=1 // pred_fallthru
      _
    // Predicated region
    $region46: #{tpu_custom_call.1} parent=1 // pred_check
      _
    $region47: #{tpu_custom_call.1} parent=1 // pred_check_branch
      %100 = sbr.rel (0) target = $region49
    $region48: #{tpu_custom_call.1} parent=1 // pred_region
      %101 = dma.done [#allocation6], 4096
    $region49: #{tpu_custom_call.1} parent=1 // pred_fallthru
      _
    // Predicated region
    $region50: #{tpu_custom_call.1} parent=1 // pred_check
      _
    $region51: #{tpu_custom_call.1} parent=1 // pred_check_branch
      %103 = sbr.rel (0) target = $region53
    $region52: #{tpu_custom_call.1} parent=1 // pred_region
      %104 = dma.done [#allocation9], 8192
    $region53: #{tpu_custom_call.1} parent=1 // pred_fallthru
      _
    // Predicated region
    $region54: #{tpu_custom_call.1} parent=1 // pred_check
      _
    $region55: #{tpu_custom_call.1} parent=1 // pred_check_branch
      %106 = sbr.rel (0) target = $region57
    $region56: #{tpu_custom_call.1} parent=1 // pred_region
      %107 = dma.done [#allocation9], 1024
    $region57: #{tpu_custom_call.1} parent=1 // pred_fallthru
      _
    // Predicated region
    $region58: #{tpu_custom_call.1} parent=1 // pred_check
      _
    $region59: #{tpu_custom_call.1} parent=1 // pred_check_branch
      %109 = sbr.rel (0) target = $region61
    $region60: #{tpu_custom_call.1} parent=1 // pred_region
      %110 = dma.done [#allocation12], 4096
    $region61: #{tpu_custom_call.1} parent=1 // pred_fallthru
      _
    %v112 = vld [vmem:[#allocation2] sm:$0xf]
    %v113 = vld [vmem:[#allocation7] sm:$0xf]
    %v114 = vld [vmem:[#allocation7 + $0x4] sm:$0xf]
    %v115 = vld [vmem:[#allocation7 + $0x8] sm:$0xf]
    %v116 = vld [vmem:[#allocation7 + $0xc] sm:$0xf]
    %v117 = vld [vmem:[#allocation7 + $0x10] sm:$0xf]
    %v118 = vld [vmem:[#allocation7 + $0x14] sm:$0xf]
    %v119 = vld [vmem:[#allocation7 + $0x18] sm:$0xf]
    %v120 = vld [vmem:[#allocation7 + $0x1c] sm:$0xf]
    %v121 = vld [vmem:[#allocation7 + $0x20] sm:$0xf]
    %v122 = vld [vmem:[#allocation7 + $0x24] sm:$0xf]
    %v123 = vld [vmem:[#allocation7 + $0x28] sm:$0xf]
    %v124 = vld [vmem:[#allocation7 + $0x2c] sm:$0xf]
    %v125 = vld [vmem:[#allocation7 + $0x30] sm:$0xf]
    %v126 = vld [vmem:[#allocation7 + $0x34] sm:$0xf]
    %v127 = vld [vmem:[#allocation7 + $0x38] sm:$0xf]
    %v128 = vld [vmem:[#allocation7 + $0x3c] sm:$0xf]
    %v129 = vld [vmem:[#allocation7 + $0x40] sm:$0xf]
    %v130 = vld [vmem:[#allocation7 + $0x44] sm:$0xf]
    %v131 = vld [vmem:[#allocation7 + $0x48] sm:$0xf]
    %v132 = vld [vmem:[#allocation7 + $0x4c] sm:$0xf]
    %v133 = vld [vmem:[#allocation7 + $0x50] sm:$0xf]
    %v134 = vld [vmem:[#allocation7 + $0x54] sm:$0xf]
    %v135 = vld [vmem:[#allocation7 + $0x58] sm:$0xf]
    %v136 = vld [vmem:[#allocation7 + $0x5c] sm:$0xf]
    %v137 = vld [vmem:[#allocation7 + $0x60] sm:$0xf]
    %v138 = vld [vmem:[#allocation7 + $0x64] sm:$0xf]
    %v139 = vld [vmem:[#allocation7 + $0x68] sm:$0xf]
    %v140 = vld [vmem:[#allocation7 + $0x6c] sm:$0xf]
    %v141 = vld [vmem:[#allocation7 + $0x70] sm:$0xf]
    %v142 = vld [vmem:[#allocation7 + $0x74] sm:$0xf]
    %v143 = vld [vmem:[#allocation7 + $0x78] sm:$0xf]
    %v144 = vld [vmem:[#allocation7 + $0x7c] sm:$0xf]
    %v145 = vld [vmem:[#allocation7 + $0x80] sm:$0xf]
    %v146 = vld [vmem:[#allocation7 + $0x84] sm:$0xf]
    %v147 = vld [vmem:[#allocation7 + $0x88] sm:$0xf]
    %v148 = vld [vmem:[#allocation7 + $0x8c] sm:$0xf]
    %v149 = vld [vmem:[#allocation7 + $0x90] sm:$0xf]
    %v150 = vld [vmem:[#allocation7 + $0x94] sm:$0xf]
    %v151 = vld [vmem:[#allocation7 + $0x98] sm:$0xf]
    %v152 = vld [vmem:[#allocation7 + $0x9c] sm:$0xf]
    %v153 = vld [vmem:[#allocation7 + $0xa0] sm:$0xf]
    %v154 = vld [vmem:[#allocation7 + $0xa4] sm:$0xf]
    %v155 = vld [vmem:[#allocation7 + $0xa8] sm:$0xf]
    %v156 = vld [vmem:[#allocation7 + $0xac] sm:$0xf]
    %v157 = vld [vmem:[#allocation7 + $0xb0] sm:$0xf]
    %v158 = vld [vmem:[#allocation7 + $0xb4] sm:$0xf]
    %v159 = vld [vmem:[#allocation7 + $0xb8] sm:$0xf]
    %v160 = vld [vmem:[#allocation7 + $0xbc] sm:$0xf]
    %v161 = vld [vmem:[#allocation7 + $0xc0] sm:$0xf]
    %v162 = vld [vmem:[#allocation7 + $0xc4] sm:$0xf]
    %v163 = vld [vmem:[#allocation7 + $0xc8] sm:$0xf]
    %v164 = vld [vmem:[#allocation7 + $0xcc] sm:$0xf]
    %v165 = vld [vmem:[#allocation7 + $0xd0] sm:$0xf]
    %v166 = vld [vmem:[#allocation7 + $0xd4] sm:$0xf]
    %v167 = vld [vmem:[#allocation7 + $0xd8] sm:$0xf]
    %v168 = vld [vmem:[#allocation7 + $0xdc] sm:$0xf]
    %v169 = vld [vmem:[#allocation7 + $0xe0] sm:$0xf]
    %v170 = vld [vmem:[#allocation7 + $0xe4] sm:$0xf]
    %v171 = vld [vmem:[#allocation7 + $0xe8] sm:$0xf]
    %v172 = vld [vmem:[#allocation7 + $0xec] sm:$0xf]
    %v173 = vld [vmem:[#allocation7 + $0xf0] sm:$0xf]
    %v174 = vld [vmem:[#allocation7 + $0xf4] sm:$0xf]
    %v175 = vld [vmem:[#allocation7 + $0xf8] sm:$0xf]
    %v176 = vld [vmem:[#allocation7 + $0xfc] sm:$0xf]
    %v177 = vld [vmem:[%s3] sm:$0x1]
    %v179 = vlaneseq
    %v180 = vshrl.u32 %v179, 7
    %v181 = vsub.s32 0, %v180
    %v182 = vrot.slane %v177, %v181
    %v186 = vunpack.c.l.s4 1966171168
    %v187 = vunpack.c.0.s8 %v186
    %v188 = vlaneseq
    %v189 = vshrl.u32 %v188, 7
    %v190 = vsub.s32 %v187, %v189
    %v191 = vrot.slane %v112, %v190
    %v192 = vcombine.high %v191, %v191
    %v194 = vunpack.c.l.s4 1966171168
    %v195 = vunpack.c.0.s8 %v194
    %v196 = vlaneseq
    %v197 = vshrl.u32 %v196, 7
    %v198 = vsub.s32 %v195, %v197
    %v199 = vrot.slane %v191, %v198
    %v201 = vunpack.c.l.s4 1966171168
    %v202 = vunpack.c.0.s8 %v201
    %v203 = vlaneseq
    %v204 = vshrl.u32 %v203, 7
    %v205 = vsub.s32 %v202, %v204
    %v206 = vrot.slane %v192, %v205
    %v207 = vcombine.high %v199, %v199
    %v208 = vcombine.high %v206, %v206
    %v277 = vunpack.c.l.b16 %v113
    %v278 = vunpack.c.l.b16 %v114
    %v279 = vunpack.c.l.b16 %v115
    %v280 = vunpack.c.l.b16 %v116
    %v281 = vunpack.c.l.b16 %v117
    %v282 = vunpack.c.l.b16 %v118
    %v283 = vunpack.c.l.b16 %v119
    %v284 = vunpack.c.l.b16 %v120
    %v285 = vunpack.c.l.b16 %v121
    %v286 = vunpack.c.l.b16 %v122
    %v287 = vunpack.c.l.b16 %v123
    %v288 = vunpack.c.l.b16 %v124
    %v289 = vunpack.c.l.b16 %v125
    %v290 = vunpack.c.l.b16 %v126
    %v291 = vunpack.c.l.b16 %v127
    %v292 = vunpack.c.l.b16 %v128
    %v293 = vunpack.c.l.b16 %v129
    %v294 = vunpack.c.l.b16 %v130
    %v295 = vunpack.c.l.b16 %v131
    %v296 = vunpack.c.l.b16 %v132
    %v297 = vunpack.c.l.b16 %v133
    %v298 = vunpack.c.l.b16 %v134
    %v299 = vunpack.c.l.b16 %v135
    %v300 = vunpack.c.l.b16 %v136
    %v301 = vunpack.c.l.b16 %v137
    %v302 = vunpack.c.l.b16 %v138
    %v303 = vunpack.c.l.b16 %v139
    %v304 = vunpack.c.l.b16 %v140
    %v305 = vunpack.c.l.b16 %v141
    %v306 = vunpack.c.l.b16 %v142
    %v307 = vunpack.c.l.b16 %v143
    %v308 = vunpack.c.l.b16 %v144
    %v309 = vunpack.c.l.b16 %v145
    %v310 = vunpack.c.l.b16 %v146
    %v311 = vunpack.c.l.b16 %v147
    %v312 = vunpack.c.l.b16 %v148
    %v313 = vunpack.c.l.b16 %v149
    %v314 = vunpack.c.l.b16 %v150
    %v315 = vunpack.c.l.b16 %v151
    %v316 = vunpack.c.l.b16 %v152
    %v317 = vunpack.c.l.b16 %v153
    %v318 = vunpack.c.l.b16 %v154
    %v319 = vunpack.c.l.b16 %v155
    %v320 = vunpack.c.l.b16 %v156
    %v321 = vunpack.c.l.b16 %v157
    %v322 = vunpack.c.l.b16 %v158
    %v323 = vunpack.c.l.b16 %v159
    %v324 = vunpack.c.l.b16 %v160
    %v325 = vunpack.c.l.b16 %v161
    %v326 = vunpack.c.l.b16 %v162
    %v327 = vunpack.c.l.b16 %v163
    %v328 = vunpack.c.l.b16 %v164
    %v329 = vunpack.c.l.b16 %v165
    %v330 = vunpack.c.l.b16 %v166
    %v331 = vunpack.c.l.b16 %v167
    %v332 = vunpack.c.l.b16 %v168
    %v333 = vunpack.c.l.b16 %v169
    %v334 = vunpack.c.l.b16 %v170
    %v335 = vunpack.c.l.b16 %v171
    %v336 = vunpack.c.l.b16 %v172
    %v337 = vunpack.c.l.b16 %v173
    %v338 = vunpack.c.l.b16 %v174
    %v339 = vunpack.c.l.b16 %v175
    %v340 = vunpack.c.l.b16 %v176
    %v341 = vpack.c.b16 %v278, %v277
    %v342 = vpack.c.b16 %v280, %v279
    %v343 = vpack.c.b16 %v282, %v281
    %v344 = vpack.c.b16 %v284, %v283
    %v345 = vpack.c.b16 %v286, %v285
    %v346 = vpack.c.b16 %v288, %v287
    %v347 = vpack.c.b16 %v290, %v289
    %v348 = vpack.c.b16 %v292, %v291
    %v349 = vpack.c.b16 %v294, %v293
    %v350 = vpack.c.b16 %v296, %v295
    %v351 = vpack.c.b16 %v298, %v297
    %v352 = vpack.c.b16 %v300, %v299
    %v353 = vpack.c.b16 %v302, %v301
    %v354 = vpack.c.b16 %v304, %v303
    %v355 = vpack.c.b16 %v306, %v305
    %v356 = vpack.c.b16 %v308, %v307
    %v357 = vpack.c.b16 %v310, %v309
    %v358 = vpack.c.b16 %v312, %v311
    %v359 = vpack.c.b16 %v314, %v313
    %v360 = vpack.c.b16 %v316, %v315
    %v361 = vpack.c.b16 %v318, %v317
    %v362 = vpack.c.b16 %v320, %v319
    %v363 = vpack.c.b16 %v322, %v321
    %v364 = vpack.c.b16 %v324, %v323
    %v365 = vpack.c.b16 %v326, %v325
    %v366 = vpack.c.b16 %v328, %v327
    %v367 = vpack.c.b16 %v330, %v329
    %v368 = vpack.c.b16 %v332, %v331
    %v369 = vpack.c.b16 %v334, %v333
    %v370 = vpack.c.b16 %v336, %v335
    %v371 = vpack.c.b16 %v338, %v337
    %v372 = vpack.c.b16 %v340, %v339
    %405 = vmatprep.subr.bf16.mxu0 0
    %406 = vmatpush1.bf16.msra.mxu0 %v348
    %407 = vmatprep.subr.bf16.mxu0 0
    %408 = vmatpush1.bf16.msra.mxu0 %v347
    %409 = vmatprep.subr.bf16.mxu0 0
    %410 = vmatpush1.bf16.msra.mxu0 %v346
    %411 = vmatprep.subr.bf16.mxu0 0
    %412 = vmatpush1.bf16.msra.mxu0 %v345
    %413 = vmatprep.subr.bf16.mxu0 0
    %414 = vmatpush1.bf16.msra.mxu0 %v344
    %415 = vmatprep.subr.bf16.mxu0 0
    %416 = vmatpush1.bf16.msra.mxu0 %v343
    %417 = vmatprep.subr.bf16.mxu0 0
    %418 = vmatpush1.bf16.msra.mxu0 %v342
    %419 = vmatprep.subr.bf16.mxu0 0
    %420 = vmatpush1.bf16.msra.mxu0 %v341
    %421 = vmatprep.subr.bf16.mxu0 0
    %422 = vmatpush2.bf16.msra.mxu0 %v356
    %423 = vmatprep.subr.bf16.mxu0 0
    %424 = vmatpush2.bf16.msra.mxu0 %v355
    %425 = vmatprep.subr.bf16.mxu0 0
    %426 = vmatpush2.bf16.msra.mxu0 %v354
    %427 = vmatprep.subr.bf16.mxu0 0
    %428 = vmatpush2.bf16.msra.mxu0 %v353
    %429 = vmatprep.subr.bf16.mxu0 0
    %430 = vmatpush2.bf16.msra.mxu0 %v352
    %431 = vmatprep.subr.bf16.mxu0 0
    %432 = vmatpush2.bf16.msra.mxu0 %v351
    %433 = vmatprep.subr.bf16.mxu0 0
    %434 = vmatpush2.bf16.msra.mxu0 %v350
    %435 = vmatprep.subr.bf16.mxu0 0
    %436 = vmatpush2.bf16.msra.mxu0 %v349
    %437 = vmatprep.mubr.bf16.mxu0 %v206
    %438 = vmatmul.mubr.bf16.gmra.mxu0 %v199
    %v439 = vpop.f32.mrf.mxu0
    %v440 = vadd.f32 %v182, %v439
    %v441 = vpop.f32.mrf.mxu0
    %v442 = vpop.f32.mrf.mxu0
    %v443 = vpop.f32.mrf.mxu0
    %444 = vdwg.mxu0
    %445 = vmatprep.subr.bf16.mxu0 0
    %446 = vmatpush1.bf16.msra.mxu0 %v364
    %447 = vmatprep.subr.bf16.mxu0 0
    %448 = vmatpush1.bf16.msra.mxu0 %v363
    %449 = vmatprep.subr.bf16.mxu0 0
    %450 = vmatpush1.bf16.msra.mxu0 %v362
    %451 = vmatprep.subr.bf16.mxu0 0
    %452 = vmatpush1.bf16.msra.mxu0 %v361
    %453 = vmatprep.subr.bf16.mxu0 0
    %454 = vmatpush1.bf16.msra.mxu0 %v360
    %455 = vmatprep.subr.bf16.mxu0 0
    %456 = vmatpush1.bf16.msra.mxu0 %v359
    %457 = vmatprep.subr.bf16.mxu0 0
    %458 = vmatpush1.bf16.msra.mxu0 %v358
    %459 = vmatprep.subr.bf16.mxu0 0
    %460 = vmatpush1.bf16.msra.mxu0 %v357
    %461 = vmatprep.subr.bf16.mxu0 0
    %462 = vmatpush2.bf16.msra.mxu0 %v372
    %463 = vmatprep.subr.bf16.mxu0 0
    %464 = vmatpush2.bf16.msra.mxu0 %v371
    %465 = vmatprep.subr.bf16.mxu0 0
    %466 = vmatpush2.bf16.msra.mxu0 %v370
    %467 = vmatprep.subr.bf16.mxu0 0
    %468 = vmatpush2.bf16.msra.mxu0 %v369
    %469 = vmatprep.subr.bf16.mxu0 0
    %470 = vmatpush2.bf16.msra.mxu0 %v368
    %471 = vmatprep.subr.bf16.mxu0 0
    %472 = vmatpush2.bf16.msra.mxu0 %v367
    %473 = vmatprep.subr.bf16.mxu0 0
    %474 = vmatpush2.bf16.msra.mxu0 %v366
    %475 = vmatprep.subr.bf16.mxu0 0
    %476 = vmatpush2.bf16.msra.mxu0 %v365
    %477 = vmatprep.mubr.bf16.mxu0 %v208
    %478 = vmatmul.mubr.bf16.gmra.mxu0 %v207
    %v479 = vpop.f32.mrf.mxu0
    %v480 = vadd.f32 %v440, %v479
    %v481 = vpop.f32.mrf.mxu0
    %v482 = vpop.f32.mrf.mxu0
    %v483 = vpop.f32.mrf.mxu0
    %484 = vdwg.mxu0
    %v485 = vmax.f32 %v480, 0.0
    %v486 = vpack.c.bf16 %v485, %v485
    %v487 = vld [vmem:[#allocation5] sm:$0x3]
    %v488 = vld [vmem:[#allocation8] sm:$0xff]
    %v489 = vld [vmem:[#allocation8 + $0x8] sm:$0xff]
    %v490 = vld [vmem:[#allocation8 + $0x10] sm:$0xff]
    %v491 = vld [vmem:[#allocation8 + $0x18] sm:$0xff]
    %v492 = vld [vmem:[#allocation8 + $0x20] sm:$0xff]
    %v493 = vld [vmem:[#allocation8 + $0x28] sm:$0xff]
    %v494 = vld [vmem:[#allocation8 + $0x30] sm:$0xff]
    %v495 = vld [vmem:[#allocation8 + $0x38] sm:$0xff]
    %v496 = vld [vmem:[#allocation8 + $0x40] sm:$0xff]
    %v497 = vld [vmem:[#allocation8 + $0x48] sm:$0xff]
    %v498 = vld [vmem:[#allocation8 + $0x50] sm:$0xff]
    %v499 = vld [vmem:[#allocation8 + $0x58] sm:$0xff]
    %v500 = vld [vmem:[#allocation8 + $0x60] sm:$0xff]
    %v501 = vld [vmem:[#allocation8 + $0x68] sm:$0xff]
    %v502 = vld [vmem:[#allocation8 + $0x70] sm:$0xff]
    %v503 = vld [vmem:[#allocation8 + $0x78] sm:$0xff]
    %v504 = vld [vmem:[#allocation8 + $0x80] sm:$0xff]
    %v505 = vld [vmem:[#allocation8 + $0x88] sm:$0xff]
    %v506 = vld [vmem:[#allocation8 + $0x90] sm:$0xff]
    %v507 = vld [vmem:[#allocation8 + $0x98] sm:$0xff]
    %v508 = vld [vmem:[#allocation8 + $0xa0] sm:$0xff]
    %v509 = vld [vmem:[#allocation8 + $0xa8] sm:$0xff]
    %v510 = vld [vmem:[#allocation8 + $0xb0] sm:$0xff]
    %v511 = vld [vmem:[#allocation8 + $0xb8] sm:$0xff]
    %v512 = vld [vmem:[#allocation8 + $0xc0] sm:$0xff]
    %v513 = vld [vmem:[#allocation8 + $0xc8] sm:$0xff]
    %v514 = vld [vmem:[#allocation8 + $0xd0] sm:$0xff]
    %v515 = vld [vmem:[#allocation8 + $0xd8] sm:$0xff]
    %v516 = vld [vmem:[#allocation8 + $0xe0] sm:$0xff]
    %v517 = vld [vmem:[#allocation8 + $0xe8] sm:$0xff]
    %v518 = vld [vmem:[#allocation8 + $0xf0] sm:$0xff]
    %v519 = vld [vmem:[#allocation8 + $0xf8] sm:$0xff]
    %v520 = vld [vmem:[#allocation8 + $0x100] sm:$0xff]
    %v521 = vld [vmem:[#allocation8 + $0x108] sm:$0xff]
    %v522 = vld [vmem:[#allocation8 + $0x110] sm:$0xff]
    %v523 = vld [vmem:[#allocation8 + $0x118] sm:$0xff]
    %v524 = vld [vmem:[#allocation8 + $0x120] sm:$0xff]
    %v525 = vld [vmem:[#allocation8 + $0x128] sm:$0xff]
    %v526 = vld [vmem:[#allocation8 + $0x130] sm:$0xff]
    %v527 = vld [vmem:[#allocation8 + $0x138] sm:$0xff]
    %v528 = vld [vmem:[#allocation8 + $0x140] sm:$0xff]
    %v529 = vld [vmem:[#allocation8 + $0x148] sm:$0xff]
    %v530 = vld [vmem:[#allocation8 + $0x150] sm:$0xff]
    %v531 = vld [vmem:[#allocation8 + $0x158] sm:$0xff]
    %v532 = vld [vmem:[#allocation8 + $0x160] sm:$0xff]
    %v533 = vld [vmem:[#allocation8 + $0x168] sm:$0xff]
    %v534 = vld [vmem:[#allocation8 + $0x170] sm:$0xff]
    %v535 = vld [vmem:[#allocation8 + $0x178] sm:$0xff]
    %v536 = vld [vmem:[#allocation8 + $0x180] sm:$0xff]
    %v537 = vld [vmem:[#allocation8 + $0x188] sm:$0xff]
    %v538 = vld [vmem:[#allocation8 + $0x190] sm:$0xff]
    %v539 = vld [vmem:[#allocation8 + $0x198] sm:$0xff]
    %v540 = vld [vmem:[#allocation8 + $0x1a0] sm:$0xff]
    %v541 = vld [vmem:[#allocation8 + $0x1a8] sm:$0xff]
    %v542 = vld [vmem:[#allocation8 + $0x1b0] sm:$0xff]
    %v543 = vld [vmem:[#allocation8 + $0x1b8] sm:$0xff]
    %v544 = vld [vmem:[#allocation8 + $0x1c0] sm:$0xff]
    %v545 = vld [vmem:[#allocation8 + $0x1c8] sm:$0xff]
    %v546 = vld [vmem:[#allocation8 + $0x1d0] sm:$0xff]
    %v547 = vld [vmem:[#allocation8 + $0x1d8] sm:$0xff]
    %v548 = vld [vmem:[#allocation8 + $0x1e0] sm:$0xff]
    %v549 = vld [vmem:[#allocation8 + $0x1e8] sm:$0xff]
    %v550 = vld [vmem:[#allocation8 + $0x1f0] sm:$0xff]
    %v551 = vld [vmem:[#allocation8 + $0x1f8] sm:$0xff]
    %v552 = vld [vmem:[%s5] sm:$0xf]
    %v554 = vlaneseq
    %v555 = vshrl.u32 %v554, 7
    %v556 = vsub.s32 0, %v555
    %v557 = vrot.slane %v552, %v556
    %v558 = vlaneseq
    %v559 = vshrl.u32 %v558, 7
    %v560 = vsub.s32 1, %v559
    %v561 = vrot.slane %v552, %v560
    %v562 = vlaneseq
    %v563 = vshrl.u32 %v562, 7
    %v564 = vsub.s32 2, %v563
    %v565 = vrot.slane %v552, %v564
    %v566 = vlaneseq
    %v567 = vshrl.u32 %v566, 7
    %v568 = vsub.s32 3, %v567
    %v569 = vrot.slane %v552, %v568
    %v576 = vunpack.c.l.s4 1966171168
    %v577 = vunpack.c.0.s8 %v576
    %v578 = vlaneseq
    %v579 = vshrl.u32 %v578, 7
    %v580 = vsub.s32 %v577, %v579
    %v581 = vrot.slane %v487, %v580
    %v582 = vcombine.high %v581, %v581
    %v584 = vunpack.c.l.s4 1966171168
    %v585 = vunpack.c.0.s8 %v584
    %v586 = vlaneseq
    %v587 = vshrl.u32 %v586, 7
    %v588 = vsub.s32 %v585, %v587
    %v589 = vrot.slane %v581, %v588
    %v591 = vunpack.c.l.s4 1966171168
    %v592 = vunpack.c.0.s8 %v591
    %v593 = vlaneseq
    %v594 = vshrl.u32 %v593, 7
    %v595 = vsub.s32 %v592, %v594
    %v596 = vrot.slane %v582, %v595
    %v663 = vunpack.c.l.b16 %v488
    %v664 = vunpack.c.h.b16 %v488
    %v665 = vunpack.c.l.b16 %v489
    %v666 = vunpack.c.h.b16 %v489
    %v667 = vunpack.c.l.b16 %v490
    %v668 = vunpack.c.h.b16 %v490
    %v669 = vunpack.c.l.b16 %v491
    %v670 = vunpack.c.h.b16 %v491
    %v671 = vunpack.c.l.b16 %v492
    %v672 = vunpack.c.h.b16 %v492
    %v673 = vunpack.c.l.b16 %v493
    %v674 = vunpack.c.h.b16 %v493
    %v675 = vunpack.c.l.b16 %v494
    %v676 = vunpack.c.h.b16 %v494
    %v677 = vunpack.c.l.b16 %v495
    %v678 = vunpack.c.h.b16 %v495
    %v679 = vunpack.c.l.b16 %v496
    %v680 = vunpack.c.h.b16 %v496
    %v681 = vunpack.c.l.b16 %v497
    %v682 = vunpack.c.h.b16 %v497
    %v683 = vunpack.c.l.b16 %v498
    %v684 = vunpack.c.h.b16 %v498
    %v685 = vunpack.c.l.b16 %v499
    %v686 = vunpack.c.h.b16 %v499
    %v687 = vunpack.c.l.b16 %v500
    %v688 = vunpack.c.h.b16 %v500
    %v689 = vunpack.c.l.b16 %v501
    %v690 = vunpack.c.h.b16 %v501
    %v691 = vunpack.c.l.b16 %v502
    %v692 = vunpack.c.h.b16 %v502
    %v693 = vunpack.c.l.b16 %v503
    %v694 = vunpack.c.h.b16 %v503
    %v695 = vunpack.c.l.b16 %v504
    %v696 = vunpack.c.h.b16 %v504
    %v697 = vunpack.c.l.b16 %v505
    %v698 = vunpack.c.h.b16 %v505
    %v699 = vunpack.c.l.b16 %v506
    %v700 = vunpack.c.h.b16 %v506
    %v701 = vunpack.c.l.b16 %v507
    %v702 = vunpack.c.h.b16 %v507
    %v703 = vunpack.c.l.b16 %v508
    %v704 = vunpack.c.h.b16 %v508
    %v705 = vunpack.c.l.b16 %v509
    %v706 = vunpack.c.h.b16 %v509
    %v707 = vunpack.c.l.b16 %v510
    %v708 = vunpack.c.h.b16 %v510
    %v709 = vunpack.c.l.b16 %v511
    %v710 = vunpack.c.h.b16 %v511
    %v711 = vunpack.c.l.b16 %v512
    %v712 = vunpack.c.h.b16 %v512
    %v713 = vunpack.c.l.b16 %v513
    %v714 = vunpack.c.h.b16 %v513
    %v715 = vunpack.c.l.b16 %v514
    %v716 = vunpack.c.h.b16 %v514
    %v717 = vunpack.c.l.b16 %v515
    %v718 = vunpack.c.h.b16 %v515
    %v719 = vunpack.c.l.b16 %v516
    %v720 = vunpack.c.h.b16 %v516
    %v721 = vunpack.c.l.b16 %v517
    %v722 = vunpack.c.h.b16 %v517
    %v723 = vunpack.c.l.b16 %v518
    %v724 = vunpack.c.h.b16 %v518
    %v725 = vunpack.c.l.b16 %v519
    %v726 = vunpack.c.h.b16 %v519
    %v727 = vunpack.c.l.b16 %v520
    %v728 = vunpack.c.h.b16 %v520
    %v729 = vunpack.c.l.b16 %v521
    %v730 = vunpack.c.h.b16 %v521
    %v731 = vunpack.c.l.b16 %v522
    %v732 = vunpack.c.h.b16 %v522
    %v733 = vunpack.c.l.b16 %v523
    %v734 = vunpack.c.h.b16 %v523
    %v735 = vunpack.c.l.b16 %v524
    %v736 = vunpack.c.h.b16 %v524
    %v737 = vunpack.c.l.b16 %v525
    %v738 = vunpack.c.h.b16 %v525
    %v739 = vunpack.c.l.b16 %v526
    %v740 = vunpack.c.h.b16 %v526
    %v741 = vunpack.c.l.b16 %v527
    %v742 = vunpack.c.h.b16 %v527
    %v743 = vunpack.c.l.b16 %v528
    %v744 = vunpack.c.h.b16 %v528
    %v745 = vunpack.c.l.b16 %v529
    %v746 = vunpack.c.h.b16 %v529
    %v747 = vunpack.c.l.b16 %v530
    %v748 = vunpack.c.h.b16 %v530
    %v749 = vunpack.c.l.b16 %v531
    %v750 = vunpack.c.h.b16 %v531
    %v751 = vunpack.c.l.b16 %v532
    %v752 = vunpack.c.h.b16 %v532
    %v753 = vunpack.c.l.b16 %v533
    %v754 = vunpack.c.h.b16 %v533
    %v755 = vunpack.c.l.b16 %v534
    %v756 = vunpack.c.h.b16 %v534
    %v757 = vunpack.c.l.b16 %v535
    %v758 = vunpack.c.h.b16 %v535
    %v759 = vunpack.c.l.b16 %v536
    %v760 = vunpack.c.h.b16 %v536
    %v761 = vunpack.c.l.b16 %v537
    %v762 = vunpack.c.h.b16 %v537
    %v763 = vunpack.c.l.b16 %v538
    %v764 = vunpack.c.h.b16 %v538
    %v765 = vunpack.c.l.b16 %v539
    %v766 = vunpack.c.h.b16 %v539
    %v767 = vunpack.c.l.b16 %v540
    %v768 = vunpack.c.h.b16 %v540
    %v769 = vunpack.c.l.b16 %v541
    %v770 = vunpack.c.h.b16 %v541
    %v771 = vunpack.c.l.b16 %v542
    %v772 = vunpack.c.h.b16 %v542
    %v773 = vunpack.c.l.b16 %v543
    %v774 = vunpack.c.h.b16 %v543
    %v775 = vunpack.c.l.b16 %v544
    %v776 = vunpack.c.h.b16 %v544
    %v777 = vunpack.c.l.b16 %v545
    %v778 = vunpack.c.h.b16 %v545
    %v779 = vunpack.c.l.b16 %v546
    %v780 = vunpack.c.h.b16 %v546
    %v781 = vunpack.c.l.b16 %v547
    %v782 = vunpack.c.h.b16 %v547
    %v783 = vunpack.c.l.b16 %v548
    %v784 = vunpack.c.h.b16 %v548
    %v785 = vunpack.c.l.b16 %v549
    %v786 = vunpack.c.h.b16 %v549
    %v787 = vunpack.c.l.b16 %v550
    %v788 = vunpack.c.h.b16 %v550
    %v789 = vunpack.c.l.b16 %v551
    %v790 = vunpack.c.h.b16 %v551
    %v791 = vpack.c.b16 %v667, %v663
    %v792 = vpack.c.b16 %v668, %v664
    %v793 = vpack.c.b16 %v669, %v665
    %v794 = vpack.c.b16 %v670, %v666
    %v795 = vpack.c.b16 %v675, %v671
    %v796 = vpack.c.b16 %v676, %v672
    %v797 = vpack.c.b16 %v677, %v673
    %v798 = vpack.c.b16 %v678, %v674
    %v799 = vpack.c.b16 %v683, %v679
    %v800 = vpack.c.b16 %v684, %v680
    %v801 = vpack.c.b16 %v685, %v681
    %v802 = vpack.c.b16 %v686, %v682
    %v803 = vpack.c.b16 %v691, %v687
    %v804 = vpack.c.b16 %v692, %v688
    %v805 = vpack.c.b16 %v693, %v689
    %v806 = vpack.c.b16 %v694, %v690
    %v807 = vpack.c.b16 %v699, %v695
    %v808 = vpack.c.b16 %v700, %v696
    %v809 = vpack.c.b16 %v701, %v697
    %v810 = vpack.c.b16 %v702, %v698
    %v811 = vpack.c.b16 %v707, %v703
    %v812 = vpack.c.b16 %v708, %v704
    %v813 = vpack.c.b16 %v709, %v705
    %v814 = vpack.c.b16 %v710, %v706
    %v815 = vpack.c.b16 %v715, %v711
    %v816 = vpack.c.b16 %v716, %v712
    %v817 = vpack.c.b16 %v717, %v713
    %v818 = vpack.c.b16 %v718, %v714
    %v819 = vpack.c.b16 %v723, %v719
    %v820 = vpack.c.b16 %v724, %v720
    %v821 = vpack.c.b16 %v725, %v721
    %v822 = vpack.c.b16 %v726, %v722
    %v823 = vpack.c.b16 %v731, %v727
    %v824 = vpack.c.b16 %v732, %v728
    %v825 = vpack.c.b16 %v733, %v729
    %v826 = vpack.c.b16 %v734, %v730
    %v827 = vpack.c.b16 %v739, %v735
    %v828 = vpack.c.b16 %v740, %v736
    %v829 = vpack.c.b16 %v741, %v737
    %v830 = vpack.c.b16 %v742, %v738
    %v831 = vpack.c.b16 %v747, %v743
    %v832 = vpack.c.b16 %v748, %v744
    %v833 = vpack.c.b16 %v749, %v745
    %v834 = vpack.c.b16 %v750, %v746
    %v835 = vpack.c.b16 %v755, %v751
    %v836 = vpack.c.b16 %v756, %v752
    %v837 = vpack.c.b16 %v757, %v753
    %v838 = vpack.c.b16 %v758, %v754
    %v839 = vpack.c.b16 %v763, %v759
    %v840 = vpack.c.b16 %v764, %v760
    %v841 = vpack.c.b16 %v765, %v761
    %v842 = vpack.c.b16 %v766, %v762
    %v843 = vpack.c.b16 %v771, %v767
    %v844 = vpack.c.b16 %v772, %v768
    %v845 = vpack.c.b16 %v773, %v769
    %v846 = vpack.c.b16 %v774, %v770
    %v847 = vpack.c.b16 %v779, %v775
    %v848 = vpack.c.b16 %v780, %v776
    %v849 = vpack.c.b16 %v781, %v777
    %v850 = vpack.c.b16 %v782, %v778
    %v851 = vpack.c.b16 %v787, %v783
    %v852 = vpack.c.b16 %v788, %v784
    %v853 = vpack.c.b16 %v789, %v785
    %v854 = vpack.c.b16 %v790, %v786
    %919 = vmatprep.subr.bf16.mxu0 %v820
    %920 = vmatpush1.bf16.msra.mxu0 %v819
    %921 = vmatprep.subr.bf16.mxu0 %v816
    %922 = vmatpush1.bf16.msra.mxu0 %v815
    %923 = vmatprep.subr.bf16.mxu0 %v812
    %924 = vmatpush1.bf16.msra.mxu0 %v811
    %925 = vmatprep.subr.bf16.mxu0 %v808
    %926 = vmatpush1.bf16.msra.mxu0 %v807
    %927 = vmatprep.subr.bf16.mxu0 %v804
    %928 = vmatpush1.bf16.msra.mxu0 %v803
    %929 = vmatprep.subr.bf16.mxu0 %v800
    %930 = vmatpush1.bf16.msra.mxu0 %v799
    %931 = vmatprep.subr.bf16.mxu0 %v796
    %932 = vmatpush1.bf16.msra.mxu0 %v795
    %933 = vmatprep.subr.bf16.mxu0 %v792
    %934 = vmatpush1.bf16.msra.mxu0 %v791
    %935 = vmatprep.subr.bf16.mxu0 %v852
    %936 = vmatpush2.bf16.msra.mxu0 %v851
    %937 = vmatprep.subr.bf16.mxu0 %v848
    %938 = vmatpush2.bf16.msra.mxu0 %v847
    %939 = vmatprep.subr.bf16.mxu0 %v844
    %940 = vmatpush2.bf16.msra.mxu0 %v843
    %941 = vmatprep.subr.bf16.mxu0 %v840
    %942 = vmatpush2.bf16.msra.mxu0 %v839
    %943 = vmatprep.subr.bf16.mxu0 %v836
    %944 = vmatpush2.bf16.msra.mxu0 %v835
    %945 = vmatprep.subr.bf16.mxu0 %v832
    %946 = vmatpush2.bf16.msra.mxu0 %v831
    %947 = vmatprep.subr.bf16.mxu0 %v828
    %948 = vmatpush2.bf16.msra.mxu0 %v827
    %949 = vmatprep.subr.bf16.mxu0 %v824
    %950 = vmatpush2.bf16.msra.mxu0 %v823
    %951 = vmatprep.mubr.bf16.mxu0 %v596
    %952 = vmatmul.mubr.bf16.gmra.mxu0 %v589
    %v953 = vpop.f32.mrf.mxu0
    %v954 = vadd.f32 %v557, %v953
    %v955 = vpop.f32.mrf.mxu0
    %v956 = vadd.f32 %v561, %v955
    %v957 = vpop.f32.mrf.mxu0
    %v958 = vpop.f32.mrf.mxu0
    %959 = vdwg.mxu0
    %960 = vmatprep.subr.bf16.mxu0 %v822
    %961 = vmatpush1.bf16.msra.mxu0 %v821
    %962 = vmatprep.subr.bf16.mxu0 %v818
    %963 = vmatpush1.bf16.msra.mxu0 %v817
    %964 = vmatprep.subr.bf16.mxu0 %v814
    %965 = vmatpush1.bf16.msra.mxu0 %v813
    %966 = vmatprep.subr.bf16.mxu0 %v810
    %967 = vmatpush1.bf16.msra.mxu0 %v809
    %968 = vmatprep.subr.bf16.mxu0 %v806
    %969 = vmatpush1.bf16.msra.mxu0 %v805
    %970 = vmatprep.subr.bf16.mxu0 %v802
    %971 = vmatpush1.bf16.msra.mxu0 %v801
    %972 = vmatprep.subr.bf16.mxu0 %v798
    %973 = vmatpush1.bf16.msra.mxu0 %v797
    %974 = vmatprep.subr.bf16.mxu0 %v794
    %975 = vmatpush1.bf16.msra.mxu0 %v793
    %976 = vmatprep.subr.bf16.mxu0 %v854
    %977 = vmatpush2.bf16.msra.mxu0 %v853
    %978 = vmatprep.subr.bf16.mxu0 %v850
    %979 = vmatpush2.bf16.msra.mxu0 %v849
    %980 = vmatprep.subr.bf16.mxu0 %v846
    %981 = vmatpush2.bf16.msra.mxu0 %v845
    %982 = vmatprep.subr.bf16.mxu0 %v842
    %983 = vmatpush2.bf16.msra.mxu0 %v841
    %984 = vmatprep.subr.bf16.mxu0 %v838
    %985 = vmatpush2.bf16.msra.mxu0 %v837
    %986 = vmatprep.subr.bf16.mxu0 %v834
    %987 = vmatpush2.bf16.msra.mxu0 %v833
    %988 = vmatprep.subr.bf16.mxu0 %v830
    %989 = vmatpush2.bf16.msra.mxu0 %v829
    %990 = vmatprep.subr.bf16.mxu0 %v826
    %991 = vmatpush2.bf16.msra.mxu0 %v825
    %992 = vmatprep.mubr.bf16.mxu0 %v596
    %993 = vmatmul.mubr.bf16.gmra.mxu0 %v589
    %v994 = vpop.f32.mrf.mxu0
    %v995 = vadd.f32 %v565, %v994
    %v996 = vpop.f32.mrf.mxu0
    %v997 = vadd.f32 %v569, %v996
    %v998 = vpop.f32.mrf.mxu0
    %v999 = vpop.f32.mrf.mxu0
    %1000 = vdwg.mxu0
    %v1001 = vmax.f32 %v954, 0.0
    %v1002 = vmax.f32 %v956, 0.0
    %v1003 = vmax.f32 %v995, 0.0
    %v1004 = vmax.f32 %v997, 0.0
    %v1005 = vpack.c.bf16 %v1001, %v1001
    %v1006 = vpack.c.bf16 %v1002, %v1002
    %v1007 = vpack.c.bf16 %v1003, %v1003
    %v1008 = vpack.c.bf16 %v1004, %v1004
    %v1009 = vld [vmem:[#allocation10] sm:$0xf]
    %v1010 = vld [vmem:[#allocation10 + $0x4] sm:$0xf]
    %v1011 = vld [vmem:[#allocation10 + $0x8] sm:$0xf]
    %v1012 = vld [vmem:[#allocation10 + $0xc] sm:$0xf]
    %v1013 = vld [vmem:[#allocation10 + $0x10] sm:$0xf]
    %v1014 = vld [vmem:[#allocation10 + $0x14] sm:$0xf]
    %v1015 = vld [vmem:[#allocation10 + $0x18] sm:$0xf]
    %v1016 = vld [vmem:[#allocation10 + $0x1c] sm:$0xf]
    %v1017 = vld [vmem:[#allocation10 + $0x20] sm:$0xf]
    %v1018 = vld [vmem:[#allocation10 + $0x24] sm:$0xf]
    %v1019 = vld [vmem:[#allocation10 + $0x28] sm:$0xf]
    %v1020 = vld [vmem:[#allocation10 + $0x2c] sm:$0xf]
    %v1021 = vld [vmem:[#allocation10 + $0x30] sm:$0xf]
    %v1022 = vld [vmem:[#allocation10 + $0x34] sm:$0xf]
    %v1023 = vld [vmem:[#allocation10 + $0x38] sm:$0xf]
    %v1024 = vld [vmem:[#allocation10 + $0x3c] sm:$0xf]
    %v1025 = vld [vmem:[#allocation11] sm:$0xf]
    %v1026 = vld [vmem:[#allocation11 + $0x4] sm:$0xf]
    %v1027 = vld [vmem:[#allocation11 + $0x8] sm:$0xf]
    %v1028 = vld [vmem:[#allocation11 + $0xc] sm:$0xf]
    %v1029 = vld [vmem:[#allocation11 + $0x10] sm:$0xf]
    %v1030 = vld [vmem:[#allocation11 + $0x14] sm:$0xf]
    %v1031 = vld [vmem:[#allocation11 + $0x18] sm:$0xf]
    %v1032 = vld [vmem:[#allocation11 + $0x1c] sm:$0xf]
    %v1033 = vld [vmem:[#allocation11 + $0x20] sm:$0xf]
    %v1034 = vld [vmem:[#allocation11 + $0x24] sm:$0xf]
    %v1035 = vld [vmem:[#allocation11 + $0x28] sm:$0xf]
    %v1036 = vld [vmem:[#allocation11 + $0x2c] sm:$0xf]
    %v1037 = vld [vmem:[#allocation11 + $0x30] sm:$0xf]
    %v1038 = vld [vmem:[#allocation11 + $0x34] sm:$0xf]
    %v1039 = vld [vmem:[#allocation11 + $0x38] sm:$0xf]
    %v1040 = vld [vmem:[#allocation11 + $0x3c] sm:$0xf]
    %v1041 = vld [vmem:[#allocation11 + $0x40] sm:$0xf]
    %v1042 = vld [vmem:[#allocation11 + $0x44] sm:$0xf]
    %v1043 = vld [vmem:[#allocation11 + $0x48] sm:$0xf]
    %v1044 = vld [vmem:[#allocation11 + $0x4c] sm:$0xf]
    %v1045 = vld [vmem:[#allocation11 + $0x50] sm:$0xf]
    %v1046 = vld [vmem:[#allocation11 + $0x54] sm:$0xf]
    %v1047 = vld [vmem:[#allocation11 + $0x58] sm:$0xf]
    %v1048 = vld [vmem:[#allocation11 + $0x5c] sm:$0xf]
    %v1049 = vld [vmem:[#allocation11 + $0x60] sm:$0xf]
    %v1050 = vld [vmem:[#allocation11 + $0x64] sm:$0xf]
    %v1051 = vld [vmem:[#allocation11 + $0x68] sm:$0xf]
    %v1052 = vld [vmem:[#allocation11 + $0x6c] sm:$0xf]
    %v1053 = vld [vmem:[#allocation11 + $0x70] sm:$0xf]
    %v1054 = vld [vmem:[#allocation11 + $0x74] sm:$0xf]
    %v1055 = vld [vmem:[#allocation11 + $0x78] sm:$0xf]
    %v1056 = vld [vmem:[#allocation11 + $0x7c] sm:$0xf]
    %v1057 = vld [vmem:[#allocation11 + $0x80] sm:$0xf]
    %v1058 = vld [vmem:[#allocation11 + $0x84] sm:$0xf]
    %v1059 = vld [vmem:[#allocation11 + $0x88] sm:$0xf]
    %v1060 = vld [vmem:[#allocation11 + $0x8c] sm:$0xf]
    %v1061 = vld [vmem:[#allocation11 + $0x90] sm:$0xf]
    %v1062 = vld [vmem:[#allocation11 + $0x94] sm:$0xf]
    %v1063 = vld [vmem:[#allocation11 + $0x98] sm:$0xf]
    %v1064 = vld [vmem:[#allocation11 + $0x9c] sm:$0xf]
    %v1065 = vld [vmem:[#allocation11 + $0xa0] sm:$0xf]
    %v1066 = vld [vmem:[#allocation11 + $0xa4] sm:$0xf]
    %v1067 = vld [vmem:[#allocation11 + $0xa8] sm:$0xf]
    %v1068 = vld [vmem:[#allocation11 + $0xac] sm:$0xf]
    %v1069 = vld [vmem:[#allocation11 + $0xb0] sm:$0xf]
    %v1070 = vld [vmem:[#allocation11 + $0xb4] sm:$0xf]
    %v1071 = vld [vmem:[#allocation11 + $0xb8] sm:$0xf]
    %v1072 = vld [vmem:[#allocation11 + $0xbc] sm:$0xf]
    %v1073 = vld [vmem:[#allocation11 + $0xc0] sm:$0xf]
    %v1074 = vld [vmem:[#allocation11 + $0xc4] sm:$0xf]
    %v1075 = vld [vmem:[#allocation11 + $0xc8] sm:$0xf]
    %v1076 = vld [vmem:[#allocation11 + $0xcc] sm:$0xf]
    %v1077 = vld [vmem:[#allocation11 + $0xd0] sm:$0xf]
    %v1078 = vld [vmem:[#allocation11 + $0xd4] sm:$0xf]
    %v1079 = vld [vmem:[#allocation11 + $0xd8] sm:$0xf]
    %v1080 = vld [vmem:[#allocation11 + $0xdc] sm:$0xf]
    %v1081 = vld [vmem:[#allocation11 + $0xe0] sm:$0xf]
    %v1082 = vld [vmem:[#allocation11 + $0xe4] sm:$0xf]
    %v1083 = vld [vmem:[#allocation11 + $0xe8] sm:$0xf]
    %v1084 = vld [vmem:[#allocation11 + $0xec] sm:$0xf]
    %v1085 = vld [vmem:[#allocation11 + $0xf0] sm:$0xf]
    %v1086 = vld [vmem:[#allocation11 + $0xf4] sm:$0xf]
    %v1087 = vld [vmem:[#allocation11 + $0xf8] sm:$0xf]
    %v1088 = vld [vmem:[#allocation11 + $0xfc] sm:$0xf]
    %v1153 = vunpack.c.l.b16 %v1025
    %v1154 = vunpack.c.l.b16 %v1026
    %v1155 = vunpack.c.l.b16 %v1027
    %v1156 = vunpack.c.l.b16 %v1028
    %v1157 = vunpack.c.l.b16 %v1029
    %v1158 = vunpack.c.l.b16 %v1030
    %v1159 = vunpack.c.l.b16 %v1031
    %v1160 = vunpack.c.l.b16 %v1032
    %v1161 = vunpack.c.l.b16 %v1033
    %v1162 = vunpack.c.l.b16 %v1034
    %v1163 = vunpack.c.l.b16 %v1035
    %v1164 = vunpack.c.l.b16 %v1036
    %v1165 = vunpack.c.l.b16 %v1037
    %v1166 = vunpack.c.l.b16 %v1038
    %v1167 = vunpack.c.l.b16 %v1039
    %v1168 = vunpack.c.l.b16 %v1040
    %v1169 = vunpack.c.l.b16 %v1041
    %v1170 = vunpack.c.l.b16 %v1042
    %v1171 = vunpack.c.l.b16 %v1043
    %v1172 = vunpack.c.l.b16 %v1044
    %v1173 = vunpack.c.l.b16 %v1045
    %v1174 = vunpack.c.l.b16 %v1046
    %v1175 = vunpack.c.l.b16 %v1047
    %v1176 = vunpack.c.l.b16 %v1048
    %v1177 = vunpack.c.l.b16 %v1049
    %v1178 = vunpack.c.l.b16 %v1050
    %v1179 = vunpack.c.l.b16 %v1051
    %v1180 = vunpack.c.l.b16 %v1052
    %v1181 = vunpack.c.l.b16 %v1053
    %v1182 = vunpack.c.l.b16 %v1054
    %v1183 = vunpack.c.l.b16 %v1055
    %v1184 = vunpack.c.l.b16 %v1056
    %v1185 = vunpack.c.l.b16 %v1057
    %v1186 = vunpack.c.l.b16 %v1058
    %v1187 = vunpack.c.l.b16 %v1059
    %v1188 = vunpack.c.l.b16 %v1060
    %v1189 = vunpack.c.l.b16 %v1061
    %v1190 = vunpack.c.l.b16 %v1062
    %v1191 = vunpack.c.l.b16 %v1063
    %v1192 = vunpack.c.l.b16 %v1064
    %v1193 = vunpack.c.l.b16 %v1065
    %v1194 = vunpack.c.l.b16 %v1066
    %v1195 = vunpack.c.l.b16 %v1067
    %v1196 = vunpack.c.l.b16 %v1068
    %v1197 = vunpack.c.l.b16 %v1069
    %v1198 = vunpack.c.l.b16 %v1070
    %v1199 = vunpack.c.l.b16 %v1071
    %v1200 = vunpack.c.l.b16 %v1072
    %v1201 = vunpack.c.l.b16 %v1073
    %v1202 = vunpack.c.l.b16 %v1074
    %v1203 = vunpack.c.l.b16 %v1075
    %v1204 = vunpack.c.l.b16 %v1076
    %v1205 = vunpack.c.l.b16 %v1077
    %v1206 = vunpack.c.l.b16 %v1078
    %v1207 = vunpack.c.l.b16 %v1079
    %v1208 = vunpack.c.l.b16 %v1080
    %v1209 = vunpack.c.l.b16 %v1081
    %v1210 = vunpack.c.l.b16 %v1082
    %v1211 = vunpack.c.l.b16 %v1083
    %v1212 = vunpack.c.l.b16 %v1084
    %v1213 = vunpack.c.l.b16 %v1085
    %v1214 = vunpack.c.l.b16 %v1086
    %v1215 = vunpack.c.l.b16 %v1087
    %v1216 = vunpack.c.l.b16 %v1088
    %v1217 = vpack.c.b16 %v1154, %v1153
    %v1218 = vpack.c.b16 %v1156, %v1155
    %v1219 = vpack.c.b16 %v1158, %v1157
    %v1220 = vpack.c.b16 %v1160, %v1159
    %v1221 = vpack.c.b16 %v1162, %v1161
    %v1222 = vpack.c.b16 %v1164, %v1163
    %v1223 = vpack.c.b16 %v1166, %v1165
    %v1224 = vpack.c.b16 %v1168, %v1167
    %v1225 = vpack.c.b16 %v1170, %v1169
    %v1226 = vpack.c.b16 %v1172, %v1171
    %v1227 = vpack.c.b16 %v1174, %v1173
    %v1228 = vpack.c.b16 %v1176, %v1175
    %v1229 = vpack.c.b16 %v1178, %v1177
    %v1230 = vpack.c.b16 %v1180, %v1179
    %v1231 = vpack.c.b16 %v1182, %v1181
    %v1232 = vpack.c.b16 %v1184, %v1183
    %v1233 = vpack.c.b16 %v1186, %v1185
    %v1234 = vpack.c.b16 %v1188, %v1187
    %v1235 = vpack.c.b16 %v1190, %v1189
    %v1236 = vpack.c.b16 %v1192, %v1191
    %v1237 = vpack.c.b16 %v1194, %v1193
    %v1238 = vpack.c.b16 %v1196, %v1195
    %v1239 = vpack.c.b16 %v1198, %v1197
    %v1240 = vpack.c.b16 %v1200, %v1199
    %v1241 = vpack.c.b16 %v1202, %v1201
    %v1242 = vpack.c.b16 %v1204, %v1203
    %v1243 = vpack.c.b16 %v1206, %v1205
    %v1244 = vpack.c.b16 %v1208, %v1207
    %v1245 = vpack.c.b16 %v1210, %v1209
    %v1246 = vpack.c.b16 %v1212, %v1211
    %v1247 = vpack.c.b16 %v1214, %v1213
    %v1248 = vpack.c.b16 %v1216, %v1215
    %1281 = vmatprep.subr.bf16.mxu0 0
    %1282 = vmatpush1.bf16.msra.mxu0 %v1224
    %1283 = vmatprep.subr.bf16.mxu0 0
    %1284 = vmatpush1.bf16.msra.mxu0 %v1223
    %1285 = vmatprep.subr.bf16.mxu0 0
    %1286 = vmatpush1.bf16.msra.mxu0 %v1222
    %1287 = vmatprep.subr.bf16.mxu0 0
    %1288 = vmatpush1.bf16.msra.mxu0 %v1221
    %1289 = vmatprep.subr.bf16.mxu0 0
    %1290 = vmatpush1.bf16.msra.mxu0 %v1220
    %1291 = vmatprep.subr.bf16.mxu0 0
    %1292 = vmatpush1.bf16.msra.mxu0 %v1219
    %1293 = vmatprep.subr.bf16.mxu0 0
    %1294 = vmatpush1.bf16.msra.mxu0 %v1218
    %1295 = vmatprep.subr.bf16.mxu0 0
    %1296 = vmatpush1.bf16.msra.mxu0 %v1217
    %1297 = vmatprep.subr.bf16.mxu0 0
    %1298 = vmatpush2.bf16.msra.mxu0 %v1232
    %1299 = vmatprep.subr.bf16.mxu0 0
    %1300 = vmatpush2.bf16.msra.mxu0 %v1231
    %1301 = vmatprep.subr.bf16.mxu0 0
    %1302 = vmatpush2.bf16.msra.mxu0 %v1230
    %1303 = vmatprep.subr.bf16.mxu0 0
    %1304 = vmatpush2.bf16.msra.mxu0 %v1229
    %1305 = vmatprep.subr.bf16.mxu0 0
    %1306 = vmatpush2.bf16.msra.mxu0 %v1228
    %1307 = vmatprep.subr.bf16.mxu0 0
    %1308 = vmatpush2.bf16.msra.mxu0 %v1227
    %1309 = vmatprep.subr.bf16.mxu0 0
    %1310 = vmatpush2.bf16.msra.mxu0 %v1226
    %1311 = vmatprep.subr.bf16.mxu0 0
    %1312 = vmatpush2.bf16.msra.mxu0 %v1225
    %1313 = vmatprep.mubr.bf16.mxu0 %v1006
    %1314 = vmatmul.mubr.bf16.gmra.mxu0 %v1005
    %v1315 = vpop.f32.mrf.mxu0
    %v1316 = vadd.f32 0.0, %v1315
    %v1317 = vpop.f32.mrf.mxu0
    %v1318 = vpop.f32.mrf.mxu0
    %v1319 = vpop.f32.mrf.mxu0
    %1320 = vdwg.mxu0
    %1321 = vmatprep.subr.bf16.mxu0 0
    %1322 = vmatpush1.bf16.msra.mxu0 %v1240
    %1323 = vmatprep.subr.bf16.mxu0 0
    %1324 = vmatpush1.bf16.msra.mxu0 %v1239
    %1325 = vmatprep.subr.bf16.mxu0 0
    %1326 = vmatpush1.bf16.msra.mxu0 %v1238
    %1327 = vmatprep.subr.bf16.mxu0 0
    %1328 = vmatpush1.bf16.msra.mxu0 %v1237
    %1329 = vmatprep.subr.bf16.mxu0 0
    %1330 = vmatpush1.bf16.msra.mxu0 %v1236
    %1331 = vmatprep.subr.bf16.mxu0 0
    %1332 = vmatpush1.bf16.msra.mxu0 %v1235
    %1333 = vmatprep.subr.bf16.mxu0 0
    %1334 = vmatpush1.bf16.msra.mxu0 %v1234
    %1335 = vmatprep.subr.bf16.mxu0 0
    %1336 = vmatpush1.bf16.msra.mxu0 %v1233
    %1337 = vmatprep.subr.bf16.mxu0 0
    %1338 = vmatpush2.bf16.msra.mxu0 %v1248
    %1339 = vmatprep.subr.bf16.mxu0 0
    %1340 = vmatpush2.bf16.msra.mxu0 %v1247
    %1341 = vmatprep.subr.bf16.mxu0 0
    %1342 = vmatpush2.bf16.msra.mxu0 %v1246
    %1343 = vmatprep.subr.bf16.mxu0 0
    %1344 = vmatpush2.bf16.msra.mxu0 %v1245
    %1345 = vmatprep.subr.bf16.mxu0 0
    %1346 = vmatpush2.bf16.msra.mxu0 %v1244
    %1347 = vmatprep.subr.bf16.mxu0 0
    %1348 = vmatpush2.bf16.msra.mxu0 %v1243
    %1349 = vmatprep.subr.bf16.mxu0 0
    %1350 = vmatpush2.bf16.msra.mxu0 %v1242
    %1351 = vmatprep.subr.bf16.mxu0 0
    %1352 = vmatpush2.bf16.msra.mxu0 %v1241
    %1353 = vmatprep.mubr.bf16.mxu0 %v1008
    %1354 = vmatmul.mubr.bf16.gmra.mxu0 %v1007
    %v1355 = vpop.f32.mrf.mxu0
    %v1356 = vadd.f32 %v1316, %v1355
    %v1357 = vpop.f32.mrf.mxu0
    %v1358 = vpop.f32.mrf.mxu0
    %v1359 = vpop.f32.mrf.mxu0
    %1360 = vdwg.mxu0
    %v1377 = vunpack.c.l.b16 %v1009
    %v1378 = vunpack.c.l.b16 %v1010
    %v1379 = vunpack.c.l.b16 %v1011
    %v1380 = vunpack.c.l.b16 %v1012
    %v1381 = vunpack.c.l.b16 %v1013
    %v1382 = vunpack.c.l.b16 %v1014
    %v1383 = vunpack.c.l.b16 %v1015
    %v1384 = vunpack.c.l.b16 %v1016
    %v1385 = vunpack.c.l.b16 %v1017
    %v1386 = vunpack.c.l.b16 %v1018
    %v1387 = vunpack.c.l.b16 %v1019
    %v1388 = vunpack.c.l.b16 %v1020
    %v1389 = vunpack.c.l.b16 %v1021
    %v1390 = vunpack.c.l.b16 %v1022
    %v1391 = vunpack.c.l.b16 %v1023
    %v1392 = vunpack.c.l.b16 %v1024
    %v1393 = vpack.c.b16 %v1378, %v1377
    %v1394 = vpack.c.b16 %v1380, %v1379
    %v1395 = vpack.c.b16 %v1382, %v1381
    %v1396 = vpack.c.b16 %v1384, %v1383
    %v1397 = vpack.c.b16 %v1386, %v1385
    %v1398 = vpack.c.b16 %v1388, %v1387
    %v1399 = vpack.c.b16 %v1390, %v1389
    %v1400 = vpack.c.b16 %v1392, %v1391
    %1409 = vmatprep.subr.bf16.mxu0 0
    %1410 = vmatpush1.bf16.msra.mxu0 %v1400
    %1411 = vmatprep.subr.bf16.mxu0 0
    %1412 = vmatpush1.bf16.msra.mxu0 %v1399
    %1413 = vmatprep.subr.bf16.mxu0 0
    %1414 = vmatpush1.bf16.msra.mxu0 %v1398
    %1415 = vmatprep.subr.bf16.mxu0 0
    %1416 = vmatpush1.bf16.msra.mxu0 %v1397
    %1417 = vmatprep.subr.bf16.mxu0 0
    %1418 = vmatpush1.bf16.msra.mxu0 %v1396
    %1419 = vmatprep.subr.bf16.mxu0 0
    %1420 = vmatpush1.bf16.msra.mxu0 %v1395
    %1421 = vmatprep.subr.bf16.mxu0 0
    %1422 = vmatpush1.bf16.msra.mxu0 %v1394
    %1423 = vmatprep.subr.bf16.mxu0 0
    %1424 = vmatpush1.bf16.msra.mxu0 %v1393
    %1425 = vmatprep.subr.bf16.mxu0 0
    %1426 = vmatpush2.bf16.msra.mxu0 0
    %1427 = vmatprep.subr.bf16.mxu0 0
    %1428 = vmatpush2.bf16.msra.mxu0 0
    %1429 = vmatprep.subr.bf16.mxu0 0
    %1430 = vmatpush2.bf16.msra.mxu0 0
    %1431 = vmatprep.subr.bf16.mxu0 0
    %1432 = vmatpush2.bf16.msra.mxu0 0
    %1433 = vmatprep.subr.bf16.mxu0 0
    %1434 = vmatpush2.bf16.msra.mxu0 0
    %1435 = vmatprep.subr.bf16.mxu0 0
    %1436 = vmatpush2.bf16.msra.mxu0 0
    %1437 = vmatprep.subr.bf16.mxu0 0
    %1438 = vmatpush2.bf16.msra.mxu0 0
    %1439 = vmatprep.subr.bf16.mxu0 0
    %1440 = vmatpush2.bf16.msra.mxu0 0
    %1441 = vmatprep.mubr.bf16.mxu0 0
    %1442 = vmatmul.mubr.bf16.gmra.mxu0 %v486
    %v1443 = vpop.f32.mrf.mxu0
    %v1444 = vadd.f32 %v1356, %v1443
    %v1445 = vpop.f32.mrf.mxu0
    %v1446 = vpop.f32.mrf.mxu0
    %v1447 = vpop.f32.mrf.mxu0
    %1448 = vdwg.mxu0
    %v1449 = vld [vmem:[%s8] sm:$0x1]
    %v1451 = vlaneseq
    %v1452 = vshrl.u32 %v1451, 7
    %v1453 = vsub.s32 0, %v1452
    %v1454 = vrot.slane %v1449, %v1453
    %v1456 = vadd.f32 %v1444, %v1454
    %1457 = vst [vmem:[#allocation13] sm:$0x3] %v1456
    // Predicated region
    $region62: #{tpu_custom_call.1} parent=1 // pred_check
      _
    $region63: #{tpu_custom_call.1} parent=1 // pred_check_branch
      %1459 = sbr.rel (0) target = $region65
    $region64: #{tpu_custom_call.1} parent=1 // pred_region
      %s1461 = ssub.s32 32, 32
      %1462 = vsyncadd [#allocation4], %s1461
      %s1464 = sshll.u32 [#allocation13], 4
      %s1465 = int_to_ptr.vmem [resolvable:$true] %s1464
      %1467 = dma.vmem_to_hbm [thread:$0]  %s1465, 32, %s9, [#allocation4]
    $region65: #{tpu_custom_call.1} parent=1 // pred_fallthru
      _
    // Predicated region
    $region66: #{tpu_custom_call.1} parent=1 // pred_check
      _
    $region67: #{tpu_custom_call.1} parent=1 // pred_check_branch
      %1469 = sbr.rel (0) target = $region69
    $region68: #{tpu_custom_call.1} parent=1 // pred_region
      %1470 = dma.done [#allocation4], 32
    $region69: #{tpu_custom_call.1} parent=1 // pred_fallthru
      _
    %1471 = vsyncpa [#allocation3], 1
    %1472 = vsyncpa [#allocation6], 1
    %1473 = vsyncpa [#allocation9], 1
    %1474 = vsyncpa [#allocation12], 1
    %1475 = vsyncpa [#allocation4], 1

</llo_original>
